<compile_context>
chip_gen: v7x
topology: tpu7x:2x2x1
jax: 0.10.0
libtpu: 0.0.40
codegen_flags: <defaults>
</compile_context>

<pallas_src>
import functools

import jax
import jax.numpy as jnp
from jax.experimental import pallas as pl
from jax.experimental.pallas import tpu as pltpu

MULTIPLIER = 1.0  # HypernetworkModule.multiplier


def _hypernet_kernel(x_ref, w1_ref, b1_ref, w2_ref, b2_ref, o_ref):
    """Residual 2-layer MLP: o = x + (relu(x @ W1 + b1) @ W2 + b2) * multiplier."""
    x = x_ref[...]            # (tm, dim) f32
    b1 = b1_ref[...]          # (1, hidden) f32 — hoisted once per tile
    b2 = b2_ref[...]          # (1, dim) f32
    # Linear 0: dim -> hidden.  bf16 MXU inputs, f32 accumulation, then ReLU.
    h = jnp.dot(x.astype(jnp.bfloat16), w1_ref[...],
                preferred_element_type=jnp.float32) + b1
    h = jnp.maximum(h, 0.0)
    # Linear 1: hidden -> dim, no activation (activate_output=False).
    y = jnp.dot(h.astype(jnp.bfloat16), w2_ref[...],
                preferred_element_type=jnp.float32) + b2
    o_ref[...] = (x + y * MULTIPLIER).astype(o_ref.dtype)


def _round_up(n, m):
    return ((n + m - 1) // m) * m


@functools.partial(jax.jit, static_argnames=("tm",))
def hypernetwork_forward(x, w1_t, b1, w2_t, b2, *, tm=512):
    """x: [..., dim].  w1_t: [dim, hidden], w2_t: [hidden, dim] (already transposed)."""
    orig_shape = x.shape
    dim = orig_shape[-1]
    hidden = w1_t.shape[1]

    x2d = x.reshape(-1, dim).astype(jnp.float32)
    n_rows = x2d.shape[0]

    # --- Lane-dense feature dims: pad to multiples of 128. -------------------
    dim_p = _round_up(dim, 128)
    hid_p = _round_up(hidden, 128)
    if dim_p != dim:
        x2d = jnp.pad(x2d, ((0, 0), (0, dim_p - dim)))
    w1_p = jnp.pad(w1_t.astype(jnp.float32), ((0, dim_p - dim), (0, hid_p - hidden)))
    w2_p = jnp.pad(w2_t.astype(jnp.float32), ((0, hid_p - hidden), (0, dim_p - dim)))
    b1_p = jnp.pad(b1.astype(jnp.float32), (0, hid_p - hidden)).reshape(1, hid_p)
    b2_p = jnp.pad(b2.astype(jnp.float32), (0, dim_p - dim)).reshape(1, dim_p)

    # bf16 weights: native MXU rate on v6e/v7x, half the DMA bytes and VMEM.
    w1_bf = w1_p.astype(jnp.bfloat16)
    w2_bf = w2_p.astype(jnp.bfloat16)

    # --- Pick the row tile: as large as possible within the VMEM budget. -----
    def vmem_bytes(t):
        return (2 * t * dim_p * 4                 # double-buffered x tiles
                + 2 * t * dim_p * 4               # double-buffered out tiles
                + 2 * 2 * dim_p * hid_p * 2       # W1 + W2 (bf16), double-buffered
                + 2 * (hid_p + dim_p) * 4         # biases, double-buffered
                + 2 * t * hid_p * 4)              # f32 intermediate h (+ headroom)

    tm_eff = _round_up(max(8, min(tm, _round_up(n_rows, 8))), 8)
    budget = 56 << 20                              # headroom under v7x's 64 MiB / TC
    while tm_eff > 256 and vmem_bytes(tm_eff) > budget:
        tm_eff //= 2

    grid = (pl.cdiv(n_rows, tm_eff),)

    vmem_limit = int(min(max(vmem_bytes(tm_eff) * 5 // 4 + (2 << 20), 32 << 20),
                         64 << 20))

    flops = 4 * n_rows * dim_p * hid_p             # two matmuls: 2 * M*K*N each
    bytes_accessed = (n_rows * dim_p * 4 * 2       # x in + out
                      + (w1_bf.size + w2_bf.size) * 2
                      + (b1_p.size + b2_p.size) * 4)
    cost = pl.CostEstimate(flops=flops, transcendentals=0,
                           bytes_accessed=bytes_accessed)

    out = pl.pallas_call(
        _hypernet_kernel,
        out_shape=jax.ShapeDtypeStruct((n_rows, dim_p), x.dtype),
        grid_spec=pltpu.PrefetchScalarGridSpec(
            num_scalar_prefetch=0,
            grid=grid,
            in_specs=[
                pl.BlockSpec((tm_eff, dim_p), lambda i: (i, 0)),   # x row tile
                pl.BlockSpec((dim_p, hid_p), lambda i: (0, 0)),    # W1^T (resident, bf16)
                pl.BlockSpec((1, hid_p), lambda i: (0, 0)),        # b1
                pl.BlockSpec((hid_p, dim_p), lambda i: (0, 0)),    # W2^T (resident, bf16)
                pl.BlockSpec((1, dim_p), lambda i: (0, 0)),        # b2
            ],
            out_specs=pl.BlockSpec((tm_eff, dim_p), lambda i: (i, 0)),
        ),
        compiler_params=pltpu.CompilerParams(
            dimension_semantics=("parallel",),     # v7x: row tiles across both TCs
            vmem_limit_bytes=vmem_limit,
        ),
        cost_estimate=cost,
    )(x2d, w1_bf, b1_p, w2_bf, b2_p)

    out = out[:, :dim]
    return out.reshape(orig_shape)


def init_params(key, dim, layer_structure=(1, 2, 1)):
    """Deterministic 'Normal' init: weight ~ N(0, 0.01), bias ~ N(0, 0) == zeros.
    Returns transposed weights ready for x @ W layout."""
    d_in = int(dim * layer_structure[0])
    d_hid = int(dim * layer_structure[1])
    d_out = int(dim * layer_structure[2])
    k1, k2 = jax.random.split(key)
    # PyTorch stores Linear weight as (out, in); build that then transpose.
    w1 = 0.01 * jax.random.normal(k1, (d_hid, d_in), dtype=jnp.float32)
    b1 = jnp.zeros((d_hid,), dtype=jnp.float32)
    w2 = 0.01 * jax.random.normal(k2, (d_out, d_hid), dtype=jnp.float32)
    b2 = jnp.zeros((d_out,), dtype=jnp.float32)
    return w1.T, b1, w2.T, b2


def _reference(x, w1_t, b1, w2_t, b2):
    """Same math as the kernel (bf16 MXU inputs, f32 accumulation), plain JAX."""
    shape = x.shape
    x2 = x.reshape(-1, shape[-1]).astype(jnp.float32)
    h = jnp.dot(x2.astype(jnp.bfloat16), w1_t.astype(jnp.bfloat16),
                preferred_element_type=jnp.float32) + b1
    h = jnp.maximum(h, 0.0)
    y = jnp.dot(h.astype(jnp.bfloat16), w2_t.astype(jnp.bfloat16),
                preferred_element_type=jnp.float32) + b2
    return (x2 + y * MULTIPLIER).reshape(shape)


if __name__ == "__main__":
    key = jax.random.PRNGKey(0)
    kx, kp, kx2, kp2 = jax.random.split(key, 4)

    # Case 1: lane-dense feature dim (multiple of 128) — the fast path.
    batch, seq, dim = 2, 8, 128
    x = jax.random.normal(kx, (batch, seq, dim), dtype=jnp.float32)
    w1_t, b1, w2_t, b2 = init_params(kp, dim, layer_structure=(1, 2, 1))
    out = jax.block_until_ready(hypernetwork_forward(x, w1_t, b1, w2_t, b2))
    ref = _reference(x, w1_t, b1, w2_t, b2)
    assert out.shape == x.shape
    assert jnp.allclose(out, ref, atol=2e-3, rtol=2e-3), float(jnp.max(jnp.abs(out - ref)))

    # Case 2: small non-multiple-of-128 dim — exercises the zero-padding path.
    batch2, seq2, dim2 = 2, 8, 32
    x2 = jax.random.normal(kx2, (batch2, seq2, dim2), dtype=jnp.float32)
    w1b_t, b1b, w2b_t, b2b = init_params(kp2, dim2, layer_structure=(1, 2, 1))
    out2 = jax.block_until_ready(hypernetwork_forward(x2, w1b_t, b1b, w2b_t, b2b))
    ref2 = _reference(x2, w1b_t, b1b, w2b_t, b2b)
    assert out2.shape == x2.shape
    assert jnp.allclose(out2, ref2, atol=2e-3, rtol=2e-3), float(jnp.max(jnp.abs(out2 - ref2)))

    print("KERNEL_OK")
</pallas_src>

<mosaic_0001>
module attributes {stable_mosaic.version = 11 : i64} {
  func.func @_hypernet_kernel(%arg0: i32, %arg1: memref<16x128xf32, #tpu.memory_space<vmem>>, %arg2: memref<128x256xbf16, #tpu.memory_space<vmem>>, %arg3: memref<1x256xf32, #tpu.memory_space<vmem>>, %arg4: memref<256x128xbf16, #tpu.memory_space<vmem>>, %arg5: memref<1x128xf32, #tpu.memory_space<vmem>>, %arg6: memref<16x128xf32, #tpu.memory_space<vmem>>) attributes {dimension_semantics = [#tpu.dimension_semantics<parallel>], iteration_bounds = array<i64: 1>, scalar_prefetch = 0 : i64, scratch_operands = 0 : i64, tpu.core_type = #tpu.core_type<tc>, window_params = [{transform_indices = @transform_0, window_bounds = array<i64: 16, 128>}, {pipeline_mode = #tpu.pipeline_mode<synchronous>, transform_indices = @transform_1, window_bounds = array<i64: 128, 256>}, {pipeline_mode = #tpu.pipeline_mode<synchronous>, transform_indices = @transform_2, window_bounds = array<i64: 1, 256>}, {pipeline_mode = #tpu.pipeline_mode<synchronous>, transform_indices = @transform_3, window_bounds = array<i64: 256, 128>}, {pipeline_mode = #tpu.pipeline_mode<synchronous>, transform_indices = @transform_4, window_bounds = array<i64: 1, 128>}, {transform_indices = @transform_5, window_bounds = array<i64: 16, 128>}]} {
    %c0 = arith.constant 0 : index
    %c0_0 = arith.constant 0 : index
    %0 = vector.load %arg1[%c0, %c0_0] : memref<16x128xf32, #tpu.memory_space<vmem>>, vector<16x128xf32>
    %c0_1 = arith.constant 0 : index
    %c0_2 = arith.constant 0 : index
    %1 = vector.load %arg3[%c0_1, %c0_2] : memref<1x256xf32, #tpu.memory_space<vmem>>, vector<1x256xf32>
    %c0_3 = arith.constant 0 : index
    %c0_4 = arith.constant 0 : index
    %2 = vector.load %arg5[%c0_3, %c0_4] : memref<1x128xf32, #tpu.memory_space<vmem>>, vector<1x128xf32>
    %3 = arith.truncf %0 : vector<16x128xf32> to vector<16x128xbf16>
    %c0_5 = arith.constant 0 : index
    %c0_6 = arith.constant 0 : index
    %4 = vector.load %arg2[%c0_5, %c0_6] : memref<128x256xbf16, #tpu.memory_space<vmem>>, vector<128x256xbf16>
    %cst = arith.constant dense<0.000000e+00> : vector<16x256xf32>
    %5 = tpu.matmul %3, %4, %cst {dimension_numbers = #tpu.dot_dimension_numbers<[1], [0], [0], [1], [0, 0, 1, 1], [], []>} : vector<16x128xbf16>, vector<128x256xbf16>, vector<16x256xf32> -> vector<16x256xf32>
    %6 = vector.broadcast %1 : vector<1x256xf32> to vector<16x256xf32>
    %7 = arith.addf %5, %6 : vector<16x256xf32>
    %cst_7 = arith.constant 0.000000e+00 : f32
    %8 = vector.broadcast %cst_7 : f32 to vector<16x256xf32>
    %9 = arith.maximumf %7, %8 : vector<16x256xf32>
    %10 = arith.truncf %9 : vector<16x256xf32> to vector<16x256xbf16>
    %c0_8 = arith.constant 0 : index
    %c0_9 = arith.constant 0 : index
    %11 = vector.load %arg4[%c0_8, %c0_9] : memref<256x128xbf16, #tpu.memory_space<vmem>>, vector<256x128xbf16>
    %cst_10 = arith.constant dense<0.000000e+00> : vector<16x128xf32>
    %12 = tpu.matmul %10, %11, %cst_10 {dimension_numbers = #tpu.dot_dimension_numbers<[1], [0], [0], [1], [0, 0, 1, 1], [], []>} : vector<16x256xbf16>, vector<256x128xbf16>, vector<16x128xf32> -> vector<16x128xf32>
    %13 = vector.broadcast %2 : vector<1x128xf32> to vector<16x128xf32>
    %14 = arith.addf %12, %13 : vector<16x128xf32>
    %cst_11 = arith.constant 1.000000e+00 : f32
    %15 = vector.broadcast %cst_11 : f32 to vector<16x128xf32>
    %16 = arith.mulf %14, %15 : vector<16x128xf32>
    %17 = arith.addf %0, %16 : vector<16x128xf32>
    %c0_12 = arith.constant 0 : index
    %c0_13 = arith.constant 0 : index
    %18 = vector.load %arg6[%c0_12, %c0_13] : memref<16x128xf32, #tpu.memory_space<vmem>>, vector<16x128xf32>
    tpu.vector_store %arg6[%c0_12, %c0_13], %17 {strides = array<i32>} : memref<16x128xf32, #tpu.memory_space<vmem>>, vector<16x128xf32>,
    return
  }
  func.func @transform_0(%arg0: i32) -> (i32, i32) {
    %c0_i32 = arith.constant 0 : i32
    %c0_i32_0 = arith.constant 0 : i32
    return %arg0, %c0_i32 : i32, i32
  }
  func.func @transform_1(%arg0: i32) -> (i32, i32) {
    %c0_i32 = arith.constant 0 : i32
    %c0_i32_0 = arith.constant 0 : i32
    %c0_i32_1 = arith.constant 0 : i32
    return %c0_i32, %c0_i32_0 : i32, i32
  }
  func.func @transform_2(%arg0: i32) -> (i32, i32) {
    %c0_i32 = arith.constant 0 : i32
    %c0_i32_0 = arith.constant 0 : i32
    %c0_i32_1 = arith.constant 0 : i32
    return %c0_i32, %c0_i32_0 : i32, i32
  }
  func.func @transform_3(%arg0: i32) -> (i32, i32) {
    %c0_i32 = arith.constant 0 : i32
    %c0_i32_0 = arith.constant 0 : i32
    %c0_i32_1 = arith.constant 0 : i32
    return %c0_i32, %c0_i32_0 : i32, i32
  }
  func.func @transform_4(%arg0: i32) -> (i32, i32) {
    %c0_i32 = arith.constant 0 : i32
    %c0_i32_0 = arith.constant 0 : i32
    %c0_i32_1 = arith.constant 0 : i32
    return %c0_i32, %c0_i32_0 : i32, i32
  }
  func.func @transform_5(%arg0: i32) -> (i32, i32) {
    %c0_i32 = arith.constant 0 : i32
    %c0_i32_0 = arith.constant 0 : i32
    return %arg0, %c0_i32 : i32, i32
  }
}

</mosaic_0001>

<llo_original>
// kernel: hypernetwork_forward.1
$region0: #{hypernetwork_forward.1}
  #allocation0 [shape = 'u32[]', space=smem, size = 0x4, offset = 0x4, fixed_abs, tag = 'smem constant byte address 0x4 - core index']
  #allocation1 [shape = 'u32[144,128]{1,0:T(1,128)}', space=vmem, size = 0x12000, scoped, tag = 'internal scratch']
  %s0 = inlined_call_operand.vmem [shape: f32[16,128], index: 0, kind: input, shape index: {}]
  %s1 = inlined_call_operand.vmem [shape: bf16[128,256], index: 1, kind: input, shape index: {}]
  %s2 = inlined_call_operand.vmem [shape: f32[1,256], index: 2, kind: input, shape index: {}]
  %s3 = inlined_call_operand.vmem [shape: bf16[256,128], index: 3, kind: input, shape index: {}]
  %s4 = inlined_call_operand.vmem [shape: f32[1,128], index: 4, kind: input, shape index: {}]
  %s5 = inlined_call_operand.hbm [shape: f32[16,128], index: 5, kind: output, shape index: {}]
  %s6 = sld [smem:[#allocation0]]
  $region30: #{hypernetwork_forward.1} parent=0
    _
  %s8 = ssub.s32 1, %s6
  %s9 = scalar_select 0, %s8, %s6
  $region1: #{hypernetwork_forward.1} parent=0
    #allocation2 [shape = 'u8[8192]{0}', space=vmem, size = 0x2000, scoped, tag = 'output window, operand 0, single buffered']
    #allocation3 [shape = 's32[1]{0}', space=sflag, size = 0x4, scoped, tag = 'scoped memory for hypernetwork_forward.1']
    %10 = vsyncpa [#allocation3], 0
    // Predicated region
    $region2: #{hypernetwork_forward.1} parent=1 // pred_check
      _
    $region3: #{hypernetwork_forward.1} parent=1 // pred_check_branch
      %12 = sbr.rel (0) target = $region5
    $region4: #{hypernetwork_forward.1} parent=1 // pred_region
      _
    $region5: #{hypernetwork_forward.1} parent=1 // pred_fallthru
      _
    // Predicated region
    $region6: #{hypernetwork_forward.1} parent=1 // pred_check
      _
    $region7: #{hypernetwork_forward.1} parent=1 // pred_check_branch
      %14 = sbr.rel (0) target = $region9
    $region8: #{hypernetwork_forward.1} parent=1 // pred_region
      _
    $region9: #{hypernetwork_forward.1} parent=1 // pred_fallthru
      _
    // Predicated region
    $region10: #{hypernetwork_forward.1} parent=1 // pred_check
      _
    $region11: #{hypernetwork_forward.1} parent=1 // pred_check_branch
      %16 = sbr.rel (0) target = $region13
    $region12: #{hypernetwork_forward.1} parent=1 // pred_region
      _
    $region13: #{hypernetwork_forward.1} parent=1 // pred_fallthru
      _
    // Predicated region
    $region14: #{hypernetwork_forward.1} parent=1 // pred_check
      _
    $region15: #{hypernetwork_forward.1} parent=1 // pred_check_branch
      %18 = sbr.rel (0) target = $region17
    $region16: #{hypernetwork_forward.1} parent=1 // pred_region
      _
    $region17: #{hypernetwork_forward.1} parent=1 // pred_fallthru
      _
    // Predicated region
    $region18: #{hypernetwork_forward.1} parent=1 // pred_check
      _
    $region19: #{hypernetwork_forward.1} parent=1 // pred_check_branch
      %20 = sbr.rel (0) target = $region21
    $region20: #{hypernetwork_forward.1} parent=1 // pred_region
      _
    $region21: #{hypernetwork_forward.1} parent=1 // pred_fallthru
      _
    %v22 = vld [vmem:[%s0] sm:$0xff]
    %v23 = vld [vmem:[%s0 + $0x8] sm:$0xff]
    %v24 = vld [vmem:[%s2] sm:$0x3]
    %v25 = vld [vmem:[%s4] sm:$0x1]
    %v26 = vpack.c.bf16 %v23, %v22
    %v27 = vld [vmem:[%s1] sm:$0xff]
    %v28 = vld [vmem:[%s1 + $0x8] sm:$0xff]
    %v29 = vld [vmem:[%s1 + $0x10] sm:$0xff]
    %v30 = vld [vmem:[%s1 + $0x18] sm:$0xff]
    %v31 = vld [vmem:[%s1 + $0x20] sm:$0xff]
    %v32 = vld [vmem:[%s1 + $0x28] sm:$0xff]
    %v33 = vld [vmem:[%s1 + $0x30] sm:$0xff]
    %v34 = vld [vmem:[%s1 + $0x38] sm:$0xff]
    %v35 = vld [vmem:[%s1 + $0x40] sm:$0xff]
    %v36 = vld [vmem:[%s1 + $0x48] sm:$0xff]
    %v37 = vld [vmem:[%s1 + $0x50] sm:$0xff]
    %v38 = vld [vmem:[%s1 + $0x58] sm:$0xff]
    %v39 = vld [vmem:[%s1 + $0x60] sm:$0xff]
    %v40 = vld [vmem:[%s1 + $0x68] sm:$0xff]
    %v41 = vld [vmem:[%s1 + $0x70] sm:$0xff]
    %v42 = vld [vmem:[%s1 + $0x78] sm:$0xff]
    %v44 = vlaneseq
    %v45 = vshrl.u32 %v44, 7
    %v46 = vsub.s32 0, %v45
    %v47 = vrot.slane %v24, %v46
    %v48 = vlaneseq
    %v49 = vshrl.u32 %v48, 7
    %v50 = vsub.s32 1, %v49
    %v51 = vrot.slane %v24, %v50
    %v70 = vunpack.c.l.b16 %v27
    %v71 = vunpack.c.h.b16 %v27
    %v72 = vunpack.c.l.b16 %v28
    %v73 = vunpack.c.h.b16 %v28
    %v74 = vunpack.c.l.b16 %v29
    %v75 = vunpack.c.h.b16 %v29
    %v76 = vunpack.c.l.b16 %v30
    %v77 = vunpack.c.h.b16 %v30
    %v78 = vunpack.c.l.b16 %v31
    %v79 = vunpack.c.h.b16 %v31
    %v80 = vunpack.c.l.b16 %v32
    %v81 = vunpack.c.h.b16 %v32
    %v82 = vunpack.c.l.b16 %v33
    %v83 = vunpack.c.h.b16 %v33
    %v84 = vunpack.c.l.b16 %v34
    %v85 = vunpack.c.h.b16 %v34
    %v86 = vunpack.c.l.b16 %v35
    %v87 = vunpack.c.h.b16 %v35
    %v88 = vunpack.c.l.b16 %v36
    %v89 = vunpack.c.h.b16 %v36
    %v90 = vunpack.c.l.b16 %v37
    %v91 = vunpack.c.h.b16 %v37
    %v92 = vunpack.c.l.b16 %v38
    %v93 = vunpack.c.h.b16 %v38
    %v94 = vunpack.c.l.b16 %v39
    %v95 = vunpack.c.h.b16 %v39
    %v96 = vunpack.c.l.b16 %v40
    %v97 = vunpack.c.h.b16 %v40
    %v98 = vunpack.c.l.b16 %v41
    %v99 = vunpack.c.h.b16 %v41
    %v100 = vunpack.c.l.b16 %v42
    %v101 = vunpack.c.h.b16 %v42
    %v102 = vpack.c.b16 %v72, %v70
    %v103 = vpack.c.b16 %v73, %v71
    %v104 = vpack.c.b16 %v76, %v74
    %v105 = vpack.c.b16 %v77, %v75
    %v106 = vpack.c.b16 %v80, %v78
    %v107 = vpack.c.b16 %v81, %v79
    %v108 = vpack.c.b16 %v84, %v82
    %v109 = vpack.c.b16 %v85, %v83
    %v110 = vpack.c.b16 %v88, %v86
    %v111 = vpack.c.b16 %v89, %v87
    %v112 = vpack.c.b16 %v92, %v90
    %v113 = vpack.c.b16 %v93, %v91
    %v114 = vpack.c.b16 %v96, %v94
    %v115 = vpack.c.b16 %v97, %v95
    %v116 = vpack.c.b16 %v100, %v98
    %v117 = vpack.c.b16 %v101, %v99
    %134 = vmatprep.subr.bf16.mxu0 %v103
    %135 = vmatpush1.bf16.msra.mxu0 %v102
    %136 = vmatprep.subr.bf16.mxu0 %v105
    %137 = vmatpush1.bf16.msra.mxu0 %v104
    %138 = vmatprep.subr.bf16.mxu0 %v107
    %139 = vmatpush1.bf16.msra.mxu0 %v106
    %140 = vmatprep.subr.bf16.mxu0 %v109
    %141 = vmatpush1.bf16.msra.mxu0 %v108
    %142 = vmatprep.subr.bf16.mxu0 %v111
    %143 = vmatpush1.bf16.msra.mxu0 %v110
    %144 = vmatprep.subr.bf16.mxu0 %v113
    %145 = vmatpush1.bf16.msra.mxu0 %v112
    %146 = vmatprep.subr.bf16.mxu0 %v115
    %147 = vmatpush1.bf16.msra.mxu0 %v114
    %148 = vmatprep.subr.bf16.mxu0 %v117
    %149 = vmatpush1.bf16.msra.mxu0 %v116
    %150 = vmatprep.subr.bf16.mxu0 0
    %151 = vmatpush1.bf16.msra.mxu0 0
    %152 = vmatprep.subr.bf16.mxu0 0
    %153 = vmatpush1.bf16.msra.mxu0 0
    %154 = vmatprep.subr.bf16.mxu0 0
    %155 = vmatpush1.bf16.msra.mxu0 0
    %156 = vmatprep.subr.bf16.mxu0 0
    %157 = vmatpush1.bf16.msra.mxu0 0
    %158 = vmatprep.subr.bf16.mxu0 0
    %159 = vmatpush1.bf16.msra.mxu0 0
    %160 = vmatprep.subr.bf16.mxu0 0
    %161 = vmatpush1.bf16.msra.mxu0 0
    %162 = vmatprep.subr.bf16.mxu0 0
    %163 = vmatpush1.bf16.msra.mxu0 0
    %164 = vmatprep.subr.bf16.mxu0 0
    %165 = vmatpush1.bf16.msra.mxu0 0
    %166 = vmatprep.mubr.bf16.mxu0 0
    %167 = vmatmul.mubr.bf16.gmra.mrb[0].mxu0 %v26
    %v168 = vpop.f32.mrb[0].mxu0
    %v169 = vadd.f32 %v47, %v168
    %v170 = vpop.f32.mrb[0].mxu0
    %v171 = vadd.f32 %v51, %v170
    %v172 = vpop.f32.mrb[0].mxu0
    %v173 = vadd.f32 %v47, %v172
    %v174 = vpop.f32.mrb[0].mxu0
    %v175 = vadd.f32 %v51, %v174
    %176 = vdwg.mxu0
    %v177 = vmax.f32 %v169, 0.0
    %v178 = vmax.f32 %v171, 0.0
    %v179 = vmax.f32 %v173, 0.0
    %v180 = vmax.f32 %v175, 0.0
    %v181 = vpack.c.bf16 %v179, %v177
    %v182 = vpack.c.bf16 %v180, %v178
    %v183 = vld [vmem:[%s3] sm:$0xf]
    %v184 = vld [vmem:[%s3 + $0x4] sm:$0xf]
    %v185 = vld [vmem:[%s3 + $0x8] sm:$0xf]
    %v186 = vld [vmem:[%s3 + $0xc] sm:$0xf]
    %v187 = vld [vmem:[%s3 + $0x10] sm:$0xf]
    %v188 = vld [vmem:[%s3 + $0x14] sm:$0xf]
    %v189 = vld [vmem:[%s3 + $0x18] sm:$0xf]
    %v190 = vld [vmem:[%s3 + $0x1c] sm:$0xf]
    %v191 = vld [vmem:[%s3 + $0x20] sm:$0xf]
    %v192 = vld [vmem:[%s3 + $0x24] sm:$0xf]
    %v193 = vld [vmem:[%s3 + $0x28] sm:$0xf]
    %v194 = vld [vmem:[%s3 + $0x2c] sm:$0xf]
    %v195 = vld [vmem:[%s3 + $0x30] sm:$0xf]
    %v196 = vld [vmem:[%s3 + $0x34] sm:$0xf]
    %v197 = vld [vmem:[%s3 + $0x38] sm:$0xf]
    %v198 = vld [vmem:[%s3 + $0x3c] sm:$0xf]
    %v199 = vld [vmem:[%s3 + $0x40] sm:$0xf]
    %v200 = vld [vmem:[%s3 + $0x44] sm:$0xf]
    %v201 = vld [vmem:[%s3 + $0x48] sm:$0xf]
    %v202 = vld [vmem:[%s3 + $0x4c] sm:$0xf]
    %v203 = vld [vmem:[%s3 + $0x50] sm:$0xf]
    %v204 = vld [vmem:[%s3 + $0x54] sm:$0xf]
    %v205 = vld [vmem:[%s3 + $0x58] sm:$0xf]
    %v206 = vld [vmem:[%s3 + $0x5c] sm:$0xf]
    %v207 = vld [vmem:[%s3 + $0x60] sm:$0xf]
    %v208 = vld [vmem:[%s3 + $0x64] sm:$0xf]
    %v209 = vld [vmem:[%s3 + $0x68] sm:$0xf]
    %v210 = vld [vmem:[%s3 + $0x6c] sm:$0xf]
    %v211 = vld [vmem:[%s3 + $0x70] sm:$0xf]
    %v212 = vld [vmem:[%s3 + $0x74] sm:$0xf]
    %v213 = vld [vmem:[%s3 + $0x78] sm:$0xf]
    %v214 = vld [vmem:[%s3 + $0x7c] sm:$0xf]
    %v216 = vlaneseq
    %v217 = vshrl.u32 %v216, 7
    %v218 = vsub.s32 0, %v217
    %v219 = vrot.slane %v25, %v218
    %v253 = vunpack.c.l.b16 %v183
    %v254 = vunpack.c.l.b16 %v184
    %v255 = vunpack.c.l.b16 %v185
    %v256 = vunpack.c.l.b16 %v186
    %v257 = vunpack.c.l.b16 %v187
    %v258 = vunpack.c.l.b16 %v188
    %v259 = vunpack.c.l.b16 %v189
    %v260 = vunpack.c.l.b16 %v190
    %v261 = vunpack.c.l.b16 %v191
    %v262 = vunpack.c.l.b16 %v192
    %v263 = vunpack.c.l.b16 %v193
    %v264 = vunpack.c.l.b16 %v194
    %v265 = vunpack.c.l.b16 %v195
    %v266 = vunpack.c.l.b16 %v196
    %v267 = vunpack.c.l.b16 %v197
    %v268 = vunpack.c.l.b16 %v198
    %v269 = vunpack.c.l.b16 %v199
    %v270 = vunpack.c.l.b16 %v200
    %v271 = vunpack.c.l.b16 %v201
    %v272 = vunpack.c.l.b16 %v202
    %v273 = vunpack.c.l.b16 %v203
    %v274 = vunpack.c.l.b16 %v204
    %v275 = vunpack.c.l.b16 %v205
    %v276 = vunpack.c.l.b16 %v206
    %v277 = vunpack.c.l.b16 %v207
    %v278 = vunpack.c.l.b16 %v208
    %v279 = vunpack.c.l.b16 %v209
    %v280 = vunpack.c.l.b16 %v210
    %v281 = vunpack.c.l.b16 %v211
    %v282 = vunpack.c.l.b16 %v212
    %v283 = vunpack.c.l.b16 %v213
    %v284 = vunpack.c.l.b16 %v214
    %v285 = vpack.c.b16 %v254, %v253
    %v286 = vpack.c.b16 %v256, %v255
    %v287 = vpack.c.b16 %v258, %v257
    %v288 = vpack.c.b16 %v260, %v259
    %v289 = vpack.c.b16 %v262, %v261
    %v290 = vpack.c.b16 %v264, %v263
    %v291 = vpack.c.b16 %v266, %v265
    %v292 = vpack.c.b16 %v268, %v267
    %v293 = vpack.c.b16 %v270, %v269
    %v294 = vpack.c.b16 %v272, %v271
    %v295 = vpack.c.b16 %v274, %v273
    %v296 = vpack.c.b16 %v276, %v275
    %v297 = vpack.c.b16 %v278, %v277
    %v298 = vpack.c.b16 %v280, %v279
    %v299 = vpack.c.b16 %v282, %v281
    %v300 = vpack.c.b16 %v284, %v283
    %317 = vmatprep.subr.bf16.mxu0 0
    %318 = vmatpush1.bf16.msra.mxu0 %v285
    %319 = vmatprep.subr.bf16.mxu0 0
    %320 = vmatpush1.bf16.msra.mxu0 %v286
    %321 = vmatprep.subr.bf16.mxu0 0
    %322 = vmatpush1.bf16.msra.mxu0 %v287
    %323 = vmatprep.subr.bf16.mxu0 0
    %324 = vmatpush1.bf16.msra.mxu0 %v288
    %325 = vmatprep.subr.bf16.mxu0 0
    %326 = vmatpush1.bf16.msra.mxu0 %v289
    %327 = vmatprep.subr.bf16.mxu0 0
    %328 = vmatpush1.bf16.msra.mxu0 %v290
    %329 = vmatprep.subr.bf16.mxu0 0
    %330 = vmatpush1.bf16.msra.mxu0 %v291
    %331 = vmatprep.subr.bf16.mxu0 0
    %332 = vmatpush1.bf16.msra.mxu0 %v292
    %333 = vmatprep.subr.bf16.mxu0 0
    %334 = vmatpush1.bf16.msra.mxu0 %v293
    %335 = vmatprep.subr.bf16.mxu0 0
    %336 = vmatpush1.bf16.msra.mxu0 %v294
    %337 = vmatprep.subr.bf16.mxu0 0
    %338 = vmatpush1.bf16.msra.mxu0 %v295
    %339 = vmatprep.subr.bf16.mxu0 0
    %340 = vmatpush1.bf16.msra.mxu0 %v296
    %341 = vmatprep.subr.bf16.mxu0 0
    %342 = vmatpush1.bf16.msra.mxu0 %v297
    %343 = vmatprep.subr.bf16.mxu0 0
    %344 = vmatpush1.bf16.msra.mxu0 %v298
    %345 = vmatprep.subr.bf16.mxu0 0
    %346 = vmatpush1.bf16.msra.mxu0 %v299
    %347 = vmatprep.subr.bf16.mxu0 0
    %348 = vmatpush1.bf16.msra.mxu0 %v300
    %349 = vmatprep.mubr.bf16.mxu0 %v182
    %350 = vmatmul.mubr.bf16.gmra.mrb[0].mxu0 %v181
    %v351 = vpop.f32.mrb[0].mxu0
    %v352 = vadd.f32 %v219, %v351
    %v353 = vpop.f32.mrb[0].mxu0
    %v354 = vpop.f32.mrb[0].mxu0
    %v355 = vadd.f32 %v219, %v354
    %v356 = vpop.f32.mrb[0].mxu0
    %357 = vdwg.mxu0
    %v358 = vadd.f32 %v22, %v352
    %v359 = vadd.f32 %v23, %v355
    %360 = vst [vmem:[#allocation2] sm:$0xff] %v358
    %361 = vst [vmem:[#allocation2 + $0x8] sm:$0xff] %v359
    // Predicated region
    $region22: #{hypernetwork_forward.1} parent=1 // pred_check
      _
    $region23: #{hypernetwork_forward.1} parent=1 // pred_check_branch
      %363 = sbr.rel (0) target = $region25
    $region24: #{hypernetwork_forward.1} parent=1 // pred_region
      %s365 = ssub.s32 256, 256
      %366 = vsyncadd [#allocation3], %s365
      %s367 = sshll.u32 [#allocation2], 4
      %s368 = int_to_ptr.vmem [resolvable:$true] %s367
      %373 = dma.vmem_to_hbm [thread:$0]  %s368, 256, %s5, [#allocation3], 128, 128, 8
    $region25: #{hypernetwork_forward.1} parent=1 // pred_fallthru
      _
    // Predicated region
    $region26: #{hypernetwork_forward.1} parent=1 // pred_check
      _
    $region27: #{hypernetwork_forward.1} parent=1 // pred_check_branch
      %375 = sbr.rel (0) target = $region29
    $region28: #{hypernetwork_forward.1} parent=1 // pred_region
      %376 = dma.done [#allocation3], 256
    $region29: #{hypernetwork_forward.1} parent=1 // pred_fallthru
      _
    %377 = vsyncpa [#allocation3], 1

</llo_original>
